<compile_context>
chip_gen: v5e
topology: v5e:2x2
jax: 0.10.0
libtpu: 0.0.40
codegen_flags: <defaults>
</compile_context>

<pallas_src>
import jax
import jax.numpy as jnp
from jax.experimental import pallas as pl
from jax.experimental.pallas import tpu as pltpu


def _round_up(n, m):
    return ((n + m - 1) // m) * m


# Per-step batch-tile cap: at tb=16384 the per-step working set (double-buffered
# bf16 x blocks + the f32 (64,tb)/(32,tb) intermediates) is ~10 MiB -- inside the
# 32 MiB scoped-VMEM default on every generation, including v7x (64 MiB physical).
_TB_CAP = 16384


def _pick_batch_tiling(B, tb_cap=_TB_CAP):
    """Returns (tb, grid_b, B_pad).

    * Batch is padded only to the 256 lane granularity (not to a tile multiple),
      so B just above a tile boundary doesn't pay a nearly-full extra tile.
    * At least 2 grid steps whenever the batch allows it, so the ("parallel",)
      axis shards across v7x's two TensorCores (no effect on v5e/v6e).
    """
    b256 = _round_up(max(B, 1), 256)
    n_tiles = 1 if b256 <= 256 else max(2, pl.cdiv(b256, tb_cap))
    tb = _round_up(pl.cdiv(b256, n_tiles), 256)
    grid_b = pl.cdiv(b256, tb)
    return tb, grid_b, tb * grid_b


def mlp_kernel(x_ref, w1_ref, b1_ref, w2_ref, b2_ref, w3_ref, b3_ref, o_ref):
    # x_ref:  (TB, 16) bf16  natural (batch, feature) layout
    # w1_ref: (64, 16) bf16   b1_ref: (64, 1) f32
    # w2_ref: (32, 64) bf16   b2_ref: (32, 1) f32
    # w3_ref: (32, 1)  f32    b3_ref: (1, 1)  f32
    # o_ref:  (1, TB)  f32   lane-dense output tile
    x = x_ref[...]                                            # (TB, 16) bf16

    # h1 = w1 @ x^T -> (64, TB): contract the feature dim of BOTH operands so
    # batch stays on the MXU N / lane dimension without a wrapper-side transpose.
    h1 = jax.lax.dot_general(
        w1_ref[...], x, (((1,), (1,)), ((), ())),
        preferred_element_type=jnp.float32,
    ) + b1_ref[...]
    h1 = jnp.maximum(h1, 0.0)                                 # (64, TB) f32 epilogue

    # Second layer: bf16 MXU inputs, f32 accumulate + epilogue.
    h2 = jnp.dot(
        w2_ref[...], h1.astype(jnp.bfloat16),
        preferred_element_type=jnp.float32,
    ) + b2_ref[...]
    h2 = jnp.maximum(h2, 0.0)                                 # (32, TB) f32

    # Final 32 -> 1 projection on the VPU (broadcast mul) + XLU (sublane reduce):
    # avoids a degenerate 1-output-row MXU matmul and keeps the output lane-dense.
    o_ref[...] = jnp.sum(w3_ref[...] * h2, axis=0, keepdims=True) + b3_ref[...]


def mlp_forward(x, params):
    """x: (B, 13) float32.  params: PyTorch-orientation weights/biases.

    Returns (B, 1) float32, matching nn.Linear semantics (y = x @ W.T + b).
    """
    B, in_dim = x.shape          # in_dim = 13
    in_pad = 16                  # contraction dim padded 13 -> 16 (sublane aligned)

    tb, grid_b, B_pad = _pick_batch_tiling(B)

    # ---- wrapper-side layout plumbing (single sequential pad+cast copy) ------
    x_p = jnp.pad(x, ((0, B_pad - B), (0, in_pad - in_dim))).astype(jnp.bfloat16)

    w1 = jnp.pad(params["w1"], ((0, 0), (0, in_pad - in_dim))).astype(jnp.bfloat16)
    b1 = params["b1"].reshape(64, 1).astype(jnp.float32)
    w2 = params["w2"].astype(jnp.bfloat16)                    # (32, 64)
    b2 = params["b2"].reshape(32, 1).astype(jnp.float32)
    w3 = params["w3"].reshape(32, 1).astype(jnp.float32)      # (1,32) -> (32,1)
    b3 = params["b3"].reshape(1, 1).astype(jnp.float32)

    flops = 2 * B_pad * (in_pad * 64 + 64 * 32 + 32)
    bytes_accessed = (
        B_pad * in_pad * 2            # x stream (bf16)
        + B_pad * 4                   # output (f32)
        + (64 * in_pad + 32 * 64) * 2 # bf16 weights (once)
        + (64 + 32 + 32 + 1) * 4      # f32 biases + w3
    )

    out_t = pl.pallas_call(
        mlp_kernel,
        out_shape=jax.ShapeDtypeStruct((1, B_pad), jnp.float32),
        grid=(grid_b,),
        in_specs=[
            pl.BlockSpec((tb, in_pad), lambda i: (i, 0)),   # x tile marches over batch
            pl.BlockSpec(w1.shape, lambda i: (0, 0)),       # weights stay VMEM-resident
            pl.BlockSpec(b1.shape, lambda i: (0, 0)),
            pl.BlockSpec(w2.shape, lambda i: (0, 0)),
            pl.BlockSpec(b2.shape, lambda i: (0, 0)),
            pl.BlockSpec(w3.shape, lambda i: (0, 0)),
            pl.BlockSpec(b3.shape, lambda i: (0, 0)),
        ],
        out_specs=pl.BlockSpec((1, tb), lambda i: (0, i)),  # lane-dense output tile
        compiler_params=pltpu.CompilerParams(
            dimension_semantics=("parallel",),
        ),
        cost_estimate=pl.CostEstimate(
            flops=flops, transcendentals=0, bytes_accessed=bytes_accessed
        ),
    )(x_p, w1, b1, w2, b2, w3, b3)

    return out_t[0, :B].reshape(B, 1)


def init_params(key):
    """Deterministic init mimicking nn.Linear's uniform(-1/sqrt(fan_in), ...).

    Weights stored in PyTorch-native (out_features, in_features) orientation.
    """
    dims = [(13, 64), (64, 32), (32, 1)]
    params = {}
    for idx, (fan_in, fan_out) in enumerate(dims, start=1):
        key, kw, kb = jax.random.split(key, 3)
        bound = 1.0 / jnp.sqrt(float(fan_in))
        params[f"w{idx}"] = jax.random.uniform(
            kw, (fan_out, fan_in), jnp.float32, -bound, bound
        )
        params[f"b{idx}"] = jax.random.uniform(
            kb, (fan_out,), jnp.float32, -bound, bound
        )
    return params


if __name__ == "__main__":
    key = jax.random.PRNGKey(0)
    key, kx = jax.random.split(key)

    batch = 8
    x = jax.random.normal(kx, (batch, 13), dtype=jnp.float32)
    params = init_params(key)

    out = mlp_forward(x, params)
    out = jax.block_until_ready(out)

    # Plain-JAX f32 reference (PyTorch semantics: y = x @ W.T + b).
    ref = x
    for i in (1, 2, 3):
        ref = ref @ params[f"w{i}"].T + params[f"b{i}"]
        if i < 3:
            ref = jnp.maximum(ref, 0.0)

    assert out.shape == (batch, 1)
    # Tolerance loosened vs f32 reference because the MXU operands are bf16.
    assert jnp.allclose(out, ref, atol=5e-2, rtol=5e-2)

    print("KERNEL_OK")
</pallas_src>

<mosaic_0001>
module attributes {stable_mosaic.version = 11 : i64} {
  func.func @mlp_kernel(%arg0: i32, %arg1: memref<256x16xbf16, #tpu.memory_space<vmem>>, %arg2: memref<64x16xbf16, #tpu.memory_space<vmem>>, %arg3: memref<64x1xf32, #tpu.memory_space<vmem>>, %arg4: memref<32x64xbf16, #tpu.memory_space<vmem>>, %arg5: memref<32x1xf32, #tpu.memory_space<vmem>>, %arg6: memref<32x1xf32, #tpu.memory_space<vmem>>, %arg7: memref<1x1xf32, #tpu.memory_space<vmem>>, %arg8: memref<1x256xf32, #tpu.memory_space<vmem>>) attributes {dimension_semantics = [#tpu.dimension_semantics<parallel>], iteration_bounds = array<i64: 1>, scalar_prefetch = 0 : i64, scratch_operands = 0 : i64, tpu.core_type = #tpu.core_type<tc>, window_params = [{transform_indices = @transform_0, window_bounds = array<i64: 256, 16>}, {pipeline_mode = #tpu.pipeline_mode<synchronous>, transform_indices = @transform_1, window_bounds = array<i64: 64, 16>}, {pipeline_mode = #tpu.pipeline_mode<synchronous>, transform_indices = @transform_2, window_bounds = array<i64: 64, 1>}, {pipeline_mode = #tpu.pipeline_mode<synchronous>, transform_indices = @transform_3, window_bounds = array<i64: 32, 64>}, {pipeline_mode = #tpu.pipeline_mode<synchronous>, transform_indices = @transform_4, window_bounds = array<i64: 32, 1>}, {pipeline_mode = #tpu.pipeline_mode<synchronous>, transform_indices = @transform_5, window_bounds = array<i64: 32, 1>}, {pipeline_mode = #tpu.pipeline_mode<synchronous>, transform_indices = @transform_6, window_bounds = array<i64: 1, 1>}, {transform_indices = @transform_7, window_bounds = array<i64: 1, 256>}]} {
    %c0 = arith.constant 0 : index
    %c0_0 = arith.constant 0 : index
    %0 = vector.load %arg1[%c0, %c0_0] : memref<256x16xbf16, #tpu.memory_space<vmem>>, vector<256x16xbf16>
    %c0_1 = arith.constant 0 : index
    %c0_2 = arith.constant 0 : index
    %1 = vector.load %arg2[%c0_1, %c0_2] : memref<64x16xbf16, #tpu.memory_space<vmem>>, vector<64x16xbf16>
    %cst = arith.constant dense<0.000000e+00> : vector<64x256xf32>
    %2 = tpu.matmul %1, %0, %cst {dimension_numbers = #tpu.dot_dimension_numbers<[1], [1], [0], [0], [0, 0, 1, 0], [], []>} : vector<64x16xbf16>, vector<256x16xbf16>, vector<64x256xf32> -> vector<64x256xf32>
    %c0_3 = arith.constant 0 : index
    %c0_4 = arith.constant 0 : index
    %3 = vector.load %arg3[%c0_3, %c0_4] : memref<64x1xf32, #tpu.memory_space<vmem>>, vector<64x1xf32>
    %4 = vector.broadcast %3 : vector<64x1xf32> to vector<64x256xf32>
    %5 = arith.addf %2, %4 : vector<64x256xf32>
    %cst_5 = arith.constant 0.000000e+00 : f32
    %6 = vector.broadcast %cst_5 : f32 to vector<64x256xf32>
    %7 = arith.maximumf %5, %6 : vector<64x256xf32>
    %c0_6 = arith.constant 0 : index
    %c0_7 = arith.constant 0 : index
    %8 = vector.load %arg4[%c0_6, %c0_7] : memref<32x64xbf16, #tpu.memory_space<vmem>>, vector<32x64xbf16>
    %9 = arith.truncf %7 : vector<64x256xf32> to vector<64x256xbf16>
    %cst_8 = arith.constant dense<0.000000e+00> : vector<32x256xf32>
    %10 = tpu.matmul %8, %9, %cst_8 {dimension_numbers = #tpu.dot_dimension_numbers<[1], [0], [0], [1], [0, 0, 1, 1], [], []>} : vector<32x64xbf16>, vector<64x256xbf16>, vector<32x256xf32> -> vector<32x256xf32>
    %c0_9 = arith.constant 0 : index
    %c0_10 = arith.constant 0 : index
    %11 = vector.load %arg5[%c0_9, %c0_10] : memref<32x1xf32, #tpu.memory_space<vmem>>, vector<32x1xf32>
    %12 = vector.broadcast %11 : vector<32x1xf32> to vector<32x256xf32>
    %13 = arith.addf %10, %12 : vector<32x256xf32>
    %cst_11 = arith.constant 0.000000e+00 : f32
    %14 = vector.broadcast %cst_11 : f32 to vector<32x256xf32>
    %15 = arith.maximumf %13, %14 : vector<32x256xf32>
    %c0_12 = arith.constant 0 : index
    %c0_13 = arith.constant 0 : index
    %16 = vector.load %arg6[%c0_12, %c0_13] : memref<32x1xf32, #tpu.memory_space<vmem>>, vector<32x1xf32>
    %17 = vector.broadcast %16 : vector<32x1xf32> to vector<32x256xf32>
    %18 = arith.mulf %17, %15 : vector<32x256xf32>
    %cst_14 = arith.constant dense<0.000000e+00> : vector<256xf32>
    %19 = vector.multi_reduction <add>, %18, %cst_14 [0] : vector<32x256xf32> to vector<256xf32>
    %20 = vector.shape_cast %19 : vector<256xf32> to vector<1x256xf32>
    %c0_15 = arith.constant 0 : index
    %c0_16 = arith.constant 0 : index
    %21 = vector.load %arg7[%c0_15, %c0_16] : memref<1x1xf32, #tpu.memory_space<vmem>>, vector<1x1xf32>
    %22 = vector.broadcast %21 : vector<1x1xf32> to vector<1x256xf32>
    %23 = arith.addf %20, %22 : vector<1x256xf32>
    %c0_17 = arith.constant 0 : index
    %c0_18 = arith.constant 0 : index
    %24 = vector.load %arg8[%c0_17, %c0_18] : memref<1x256xf32, #tpu.memory_space<vmem>>, vector<1x256xf32>
    tpu.vector_store %arg8[%c0_17, %c0_18], %23 {strides = array<i32>} : memref<1x256xf32, #tpu.memory_space<vmem>>, vector<1x256xf32>,
    return
  }
  func.func @transform_0(%arg0: i32) -> (i32, i32) {
    %c0_i32 = arith.constant 0 : i32
    %c0_i32_0 = arith.constant 0 : i32
    return %arg0, %c0_i32 : i32, i32
  }
  func.func @transform_1(%arg0: i32) -> (i32, i32) {
    %c0_i32 = arith.constant 0 : i32
    %c0_i32_0 = arith.constant 0 : i32
    %c0_i32_1 = arith.constant 0 : i32
    return %c0_i32, %c0_i32_0 : i32, i32
  }
  func.func @transform_2(%arg0: i32) -> (i32, i32) {
    %c0_i32 = arith.constant 0 : i32
    %c0_i32_0 = arith.constant 0 : i32
    %c0_i32_1 = arith.constant 0 : i32
    return %c0_i32, %c0_i32_0 : i32, i32
  }
  func.func @transform_3(%arg0: i32) -> (i32, i32) {
    %c0_i32 = arith.constant 0 : i32
    %c0_i32_0 = arith.constant 0 : i32
    %c0_i32_1 = arith.constant 0 : i32
    return %c0_i32, %c0_i32_0 : i32, i32
  }
  func.func @transform_4(%arg0: i32) -> (i32, i32) {
    %c0_i32 = arith.constant 0 : i32
    %c0_i32_0 = arith.constant 0 : i32
    %c0_i32_1 = arith.constant 0 : i32
    return %c0_i32, %c0_i32_0 : i32, i32
  }
  func.func @transform_5(%arg0: i32) -> (i32, i32) {
    %c0_i32 = arith.constant 0 : i32
    %c0_i32_0 = arith.constant 0 : i32
    %c0_i32_1 = arith.constant 0 : i32
    return %c0_i32, %c0_i32_0 : i32, i32
  }
  func.func @transform_6(%arg0: i32) -> (i32, i32) {
    %c0_i32 = arith.constant 0 : i32
    %c0_i32_0 = arith.constant 0 : i32
    %c0_i32_1 = arith.constant 0 : i32
    return %c0_i32, %c0_i32_0 : i32, i32
  }
  func.func @transform_7(%arg0: i32) -> (i32, i32) {
    %c0_i32 = arith.constant 0 : i32
    %c0_i32_0 = arith.constant 0 : i32
    return %c0_i32, %arg0 : i32, i32
  }
}

</mosaic_0001>

<llo_original>
// kernel: tpu_custom_call.1
$region0: #{tpu_custom_call.1}
  #allocation0 [shape = 'u32[]', space=smem, size = 0x4, offset = 0x4, fixed_abs, tag = 'smem constant byte address 0x4 - core index']
  #allocation1 [shape = 'u32[72,128]{1,0:T(1,128)}', space=vmem, size = 0x9000, scoped, tag = 'internal scratch']
  #allocation2 [shape = 'f32[1,1]{1,0:T(1,128)S(1)}', space=vmem, size = 0x200, scoped, tag = 'scoped memory for tpu_custom_call.1']
  %s0 = inlined_call_operand.vmem [shape: bf16[256,16], index: 0, kind: input, shape index: {}]
  %s1 = inlined_call_operand.vmem [shape: bf16[64,16], index: 1, kind: input, shape index: {}]
  %s2 = inlined_call_operand.vmem [shape: f32[64,1], index: 2, kind: input, shape index: {}]
  %s3 = inlined_call_operand.vmem [shape: bf16[32,64], index: 3, kind: input, shape index: {}]
  %s4 = inlined_call_operand.vmem [shape: f32[32,1], index: 4, kind: input, shape index: {}]
  %s5 = inlined_call_operand.vmem [shape: f32[32,1], index: 5, kind: input, shape index: {}]
  %s6 = inlined_call_operand.<no memory space> [shape: f32[1,1], index: 6, kind: input, shape index: {}]
  %s7 = inlined_call_operand.hbm [shape: f32[1,256], index: 7, kind: output, shape index: {}]
  %s8 = sld [smem:[#allocation0]]
  $region38: #{tpu_custom_call.1} parent=0
    _
  %s10 = ssub.s32 1, %s8
  %s11 = scalar_select 0, %s10, %s8
  %v12 = vstv %s6
  %13 = vst [vmem:[#allocation2] sm:$0x1] %v12
  $region1: #{tpu_custom_call.1} parent=0
    #allocation3 [shape = 'u8[1024]{0}', space=vmem, size = 0x400, scoped, tag = 'output window, operand 0, single buffered']
    #allocation4 [shape = 's32[1]{0}', space=sflag, size = 0x4, scoped, tag = 'scoped memory for tpu_custom_call.1']
    %14 = vsyncpa [#allocation4], 0
    // Predicated region
    $region2: #{tpu_custom_call.1} parent=1 // pred_check
      _
    $region3: #{tpu_custom_call.1} parent=1 // pred_check_branch
      %16 = sbr.rel (0) target = $region5
    $region4: #{tpu_custom_call.1} parent=1 // pred_region
      _
    $region5: #{tpu_custom_call.1} parent=1 // pred_fallthru
      _
    // Predicated region
    $region6: #{tpu_custom_call.1} parent=1 // pred_check
      _
    $region7: #{tpu_custom_call.1} parent=1 // pred_check_branch
      %18 = sbr.rel (0) target = $region9
    $region8: #{tpu_custom_call.1} parent=1 // pred_region
      _
    $region9: #{tpu_custom_call.1} parent=1 // pred_fallthru
      _
    // Predicated region
    $region10: #{tpu_custom_call.1} parent=1 // pred_check
      _
    $region11: #{tpu_custom_call.1} parent=1 // pred_check_branch
      %20 = sbr.rel (0) target = $region13
    $region12: #{tpu_custom_call.1} parent=1 // pred_region
      _
    $region13: #{tpu_custom_call.1} parent=1 // pred_fallthru
      _
    // Predicated region
    $region14: #{tpu_custom_call.1} parent=1 // pred_check
      _
    $region15: #{tpu_custom_call.1} parent=1 // pred_check_branch
      %22 = sbr.rel (0) target = $region17
    $region16: #{tpu_custom_call.1} parent=1 // pred_region
      _
    $region17: #{tpu_custom_call.1} parent=1 // pred_fallthru
      _
    // Predicated region
    $region18: #{tpu_custom_call.1} parent=1 // pred_check
      _
    $region19: #{tpu_custom_call.1} parent=1 // pred_check_branch
      %24 = sbr.rel (0) target = $region21
    $region20: #{tpu_custom_call.1} parent=1 // pred_region
      _
    $region21: #{tpu_custom_call.1} parent=1 // pred_fallthru
      _
    // Predicated region
    $region22: #{tpu_custom_call.1} parent=1 // pred_check
      _
    $region23: #{tpu_custom_call.1} parent=1 // pred_check_branch
      %26 = sbr.rel (0) target = $region25
    $region24: #{tpu_custom_call.1} parent=1 // pred_region
      _
    $region25: #{tpu_custom_call.1} parent=1 // pred_fallthru
      _
    // Predicated region
    $region26: #{tpu_custom_call.1} parent=1 // pred_check
      _
    $region27: #{tpu_custom_call.1} parent=1 // pred_check_branch
      %28 = sbr.rel (0) target = $region29
    $region28: #{tpu_custom_call.1} parent=1 // pred_region
      _
    $region29: #{tpu_custom_call.1} parent=1 // pred_fallthru
      _
    %v30 = vld [vmem:[%s0] sm:$0xf]
    %v31 = vld [vmem:[%s0 + $0x4] sm:$0xf]
    %v32 = vld [vmem:[%s0 + $0x8] sm:$0xf]
    %v33 = vld [vmem:[%s0 + $0xc] sm:$0xf]
    %v34 = vld [vmem:[%s0 + $0x10] sm:$0xf]
    %v35 = vld [vmem:[%s0 + $0x14] sm:$0xf]
    %v36 = vld [vmem:[%s0 + $0x18] sm:$0xf]
    %v37 = vld [vmem:[%s0 + $0x1c] sm:$0xf]
    %v38 = vld [vmem:[%s0 + $0x20] sm:$0xf]
    %v39 = vld [vmem:[%s0 + $0x24] sm:$0xf]
    %v40 = vld [vmem:[%s0 + $0x28] sm:$0xf]
    %v41 = vld [vmem:[%s0 + $0x2c] sm:$0xf]
    %v42 = vld [vmem:[%s0 + $0x30] sm:$0xf]
    %v43 = vld [vmem:[%s0 + $0x34] sm:$0xf]
    %v44 = vld [vmem:[%s0 + $0x38] sm:$0xf]
    %v45 = vld [vmem:[%s0 + $0x3c] sm:$0xf]
    %v46 = vld [vmem:[%s0 + $0x40] sm:$0xf]
    %v47 = vld [vmem:[%s0 + $0x44] sm:$0xf]
    %v48 = vld [vmem:[%s0 + $0x48] sm:$0xf]
    %v49 = vld [vmem:[%s0 + $0x4c] sm:$0xf]
    %v50 = vld [vmem:[%s0 + $0x50] sm:$0xf]
    %v51 = vld [vmem:[%s0 + $0x54] sm:$0xf]
    %v52 = vld [vmem:[%s0 + $0x58] sm:$0xf]
    %v53 = vld [vmem:[%s0 + $0x5c] sm:$0xf]
    %v54 = vld [vmem:[%s0 + $0x60] sm:$0xf]
    %v55 = vld [vmem:[%s0 + $0x64] sm:$0xf]
    %v56 = vld [vmem:[%s0 + $0x68] sm:$0xf]
    %v57 = vld [vmem:[%s0 + $0x6c] sm:$0xf]
    %v58 = vld [vmem:[%s0 + $0x70] sm:$0xf]
    %v59 = vld [vmem:[%s0 + $0x74] sm:$0xf]
    %v60 = vld [vmem:[%s0 + $0x78] sm:$0xf]
    %v61 = vld [vmem:[%s0 + $0x7c] sm:$0xf]
    %v62 = vld [vmem:[%s1] sm:$0xf]
    %v63 = vld [vmem:[%s1 + $0x4] sm:$0xf]
    %v64 = vld [vmem:[%s1 + $0x8] sm:$0xf]
    %v65 = vld [vmem:[%s1 + $0xc] sm:$0xf]
    %v66 = vld [vmem:[%s1 + $0x10] sm:$0xf]
    %v67 = vld [vmem:[%s1 + $0x14] sm:$0xf]
    %v68 = vld [vmem:[%s1 + $0x18] sm:$0xf]
    %v69 = vld [vmem:[%s1 + $0x1c] sm:$0xf]
    %v70 = vld [vmem:[%s2] sm:$0xff]
    %v71 = vld [vmem:[%s2 + $0x8] sm:$0xff]
    %v72 = vld [vmem:[%s2 + $0x10] sm:$0xff]
    %v73 = vld [vmem:[%s2 + $0x18] sm:$0xff]
    %v74 = vld [vmem:[%s2 + $0x20] sm:$0xff]
    %v75 = vld [vmem:[%s2 + $0x28] sm:$0xff]
    %v76 = vld [vmem:[%s2 + $0x30] sm:$0xff]
    %v77 = vld [vmem:[%s2 + $0x38] sm:$0xff]
    %79 = vset.pattern.permute.xlu0 0
    %80 = vperm.xlu0 %79, %v70
    %v81 = vpop.permute.xlu0 %80
    %84 = vset.pattern.permute.xlu0 0
    %85 = vperm.xlu0 %84, %v71
    %v86 = vpop.permute.xlu0 %85
    %89 = vset.pattern.permute.xlu0 0
    %90 = vperm.xlu0 %89, %v72
    %v91 = vpop.permute.xlu0 %90
    %94 = vset.pattern.permute.xlu0 0
    %95 = vperm.xlu0 %94, %v73
    %v96 = vpop.permute.xlu0 %95
    %99 = vset.pattern.permute.xlu0 0
    %100 = vperm.xlu0 %99, %v74
    %v101 = vpop.permute.xlu0 %100
    %104 = vset.pattern.permute.xlu0 0
    %105 = vperm.xlu0 %104, %v75
    %v106 = vpop.permute.xlu0 %105
    %109 = vset.pattern.permute.xlu0 0
    %110 = vperm.xlu0 %109, %v76
    %v111 = vpop.permute.xlu0 %110
    %114 = vset.pattern.permute.xlu0 0
    %115 = vperm.xlu0 %114, %v77
    %v116 = vpop.permute.xlu0 %115
    %v126 = vunpack.c.l.b16 %v62
    %v127 = vunpack.c.l.b16 %v63
    %v128 = vunpack.c.l.b16 %v64
    %v129 = vunpack.c.l.b16 %v65
    %v130 = vunpack.c.l.b16 %v66
    %v131 = vunpack.c.l.b16 %v67
    %v132 = vunpack.c.l.b16 %v68
    %v133 = vunpack.c.l.b16 %v69
    %v134 = vpack.c.b16 %v127, %v126
    %v135 = vpack.c.b16 %v129, %v128
    %v136 = vpack.c.b16 %v131, %v130
    %v137 = vpack.c.b16 %v133, %v132
    %v170 = vunpack.c.l.b16 %v30
    %v171 = vunpack.c.l.b16 %v31
    %v172 = vunpack.c.l.b16 %v32
    %v173 = vunpack.c.l.b16 %v33
    %v174 = vunpack.c.l.b16 %v34
    %v175 = vunpack.c.l.b16 %v35
    %v176 = vunpack.c.l.b16 %v36
    %v177 = vunpack.c.l.b16 %v37
    %v178 = vunpack.c.l.b16 %v38
    %v179 = vunpack.c.l.b16 %v39
    %v180 = vunpack.c.l.b16 %v40
    %v181 = vunpack.c.l.b16 %v41
    %v182 = vunpack.c.l.b16 %v42
    %v183 = vunpack.c.l.b16 %v43
    %v184 = vunpack.c.l.b16 %v44
    %v185 = vunpack.c.l.b16 %v45
    %v186 = vunpack.c.l.b16 %v46
    %v187 = vunpack.c.l.b16 %v47
    %v188 = vunpack.c.l.b16 %v48
    %v189 = vunpack.c.l.b16 %v49
    %v190 = vunpack.c.l.b16 %v50
    %v191 = vunpack.c.l.b16 %v51
    %v192 = vunpack.c.l.b16 %v52
    %v193 = vunpack.c.l.b16 %v53
    %v194 = vunpack.c.l.b16 %v54
    %v195 = vunpack.c.l.b16 %v55
    %v196 = vunpack.c.l.b16 %v56
    %v197 = vunpack.c.l.b16 %v57
    %v198 = vunpack.c.l.b16 %v58
    %v199 = vunpack.c.l.b16 %v59
    %v200 = vunpack.c.l.b16 %v60
    %v201 = vunpack.c.l.b16 %v61
    %v202 = vpack.c.b16 %v171, %v170
    %v203 = vpack.c.b16 %v173, %v172
    %v204 = vpack.c.b16 %v175, %v174
    %v205 = vpack.c.b16 %v177, %v176
    %v206 = vpack.c.b16 %v179, %v178
    %v207 = vpack.c.b16 %v181, %v180
    %v208 = vpack.c.b16 %v183, %v182
    %v209 = vpack.c.b16 %v185, %v184
    %v210 = vpack.c.b16 %v187, %v186
    %v211 = vpack.c.b16 %v189, %v188
    %v212 = vpack.c.b16 %v191, %v190
    %v213 = vpack.c.b16 %v193, %v192
    %v214 = vpack.c.b16 %v195, %v194
    %v215 = vpack.c.b16 %v197, %v196
    %v216 = vpack.c.b16 %v199, %v198
    %v217 = vpack.c.b16 %v201, %v200
    %vm218 = vcmask 130048
    %v220 = vsel %vm218, %v134, 0
    %v223 = vsel %vm218, %v135, 0
    %v226 = vsel %vm218, %v136, 0
    %v229 = vsel %vm218, %v137, 0
    %v232 = vsel %vm218, %v202, 0
    %v235 = vsel %vm218, %v203, 0
    %v238 = vsel %vm218, %v204, 0
    %v241 = vsel %vm218, %v205, 0
    %v244 = vsel %vm218, %v206, 0
    %v247 = vsel %vm218, %v207, 0
    %v250 = vsel %vm218, %v208, 0
    %v253 = vsel %vm218, %v209, 0
    %v256 = vsel %vm218, %v210, 0
    %v259 = vsel %vm218, %v211, 0
    %v262 = vsel %vm218, %v212, 0
    %v265 = vsel %vm218, %v213, 0
    %v268 = vsel %vm218, %v214, 0
    %v271 = vsel %vm218, %v215, 0
    %v274 = vsel %vm218, %v216, 0
    %v277 = vsel %vm218, %v217, 0
    %279 = vmatpush.bf16.xpose.msra.mxu0 %v253
    %280 = vmatpush.bf16.xpose.msra.mxu0 %v250
    %281 = vmatpush.bf16.xpose.msra.mxu0 %v247
    %282 = vmatpush.bf16.xpose.msra.mxu0 %v244
    %283 = vmatpush.bf16.xpose.msra.mxu0 %v241
    %284 = vmatpush.bf16.xpose.msra.mxu0 %v238
    %285 = vmatpush.bf16.xpose.msra.mxu0 %v235
    %286 = vmatpush.bf16.xpose.msra.mxu0 %v232
    %287 = vmatmul.bf16.gmra.mxu0 %v220
    %v288 = vpop.f32.mrf.mxu0
    %v289 = vadd.f32 %v81, %v288
    %v290 = vpop.f32.mrf.mxu0
    %v291 = vadd.f32 %v86, %v290
    %292 = vmatmul.bf16.gmra.mxu0 %v223
    %v293 = vpop.f32.mrf.mxu0
    %v294 = vadd.f32 %v91, %v293
    %v295 = vpop.f32.mrf.mxu0
    %v296 = vadd.f32 %v96, %v295
    %297 = vmatmul.bf16.gmra.mxu0 %v226
    %v298 = vpop.f32.mrf.mxu0
    %v299 = vadd.f32 %v101, %v298
    %v300 = vpop.f32.mrf.mxu0
    %v301 = vadd.f32 %v106, %v300
    %302 = vmatmul.bf16.gmra.mxu0 %v229
    %v303 = vpop.f32.mrf.mxu0
    %v304 = vadd.f32 %v111, %v303
    %v305 = vpop.f32.mrf.mxu0
    %v306 = vadd.f32 %v116, %v305
    %307 = vdwg.mxu0
    %308 = vmatpush.bf16.xpose.msra.mxu0 %v277
    %309 = vmatpush.bf16.xpose.msra.mxu0 %v274
    %310 = vmatpush.bf16.xpose.msra.mxu0 %v271
    %311 = vmatpush.bf16.xpose.msra.mxu0 %v268
    %312 = vmatpush.bf16.xpose.msra.mxu0 %v265
    %313 = vmatpush.bf16.xpose.msra.mxu0 %v262
    %314 = vmatpush.bf16.xpose.msra.mxu0 %v259
    %315 = vmatpush.bf16.xpose.msra.mxu0 %v256
    %316 = vmatmul.bf16.gmra.mxu0 %v220
    %v317 = vpop.f32.mrf.mxu0
    %v318 = vadd.f32 %v81, %v317
    %v319 = vpop.f32.mrf.mxu0
    %v320 = vadd.f32 %v86, %v319
    %321 = vmatmul.bf16.gmra.mxu0 %v223
    %v322 = vpop.f32.mrf.mxu0
    %v323 = vadd.f32 %v91, %v322
    %v324 = vpop.f32.mrf.mxu0
    %v325 = vadd.f32 %v96, %v324
    %326 = vmatmul.bf16.gmra.mxu0 %v226
    %v327 = vpop.f32.mrf.mxu0
    %v328 = vadd.f32 %v101, %v327
    %v329 = vpop.f32.mrf.mxu0
    %v330 = vadd.f32 %v106, %v329
    %331 = vmatmul.bf16.gmra.mxu0 %v229
    %v332 = vpop.f32.mrf.mxu0
    %v333 = vadd.f32 %v111, %v332
    %v334 = vpop.f32.mrf.mxu0
    %v335 = vadd.f32 %v116, %v334
    %336 = vdwg.mxu0
    %v337 = vmax.f32 %v289, 0.0
    %v338 = vmax.f32 %v318, 0.0
    %v339 = vmax.f32 %v291, 0.0
    %v340 = vmax.f32 %v320, 0.0
    %v341 = vmax.f32 %v294, 0.0
    %v342 = vmax.f32 %v323, 0.0
    %v343 = vmax.f32 %v296, 0.0
    %v344 = vmax.f32 %v325, 0.0
    %v345 = vmax.f32 %v299, 0.0
    %v346 = vmax.f32 %v328, 0.0
    %v347 = vmax.f32 %v301, 0.0
    %v348 = vmax.f32 %v330, 0.0
    %v349 = vmax.f32 %v304, 0.0
    %v350 = vmax.f32 %v333, 0.0
    %v351 = vmax.f32 %v306, 0.0
    %v352 = vmax.f32 %v335, 0.0
    %v353 = vld [vmem:[%s3] sm:$0xf]
    %v354 = vld [vmem:[%s3 + $0x4] sm:$0xf]
    %v355 = vld [vmem:[%s3 + $0x8] sm:$0xf]
    %v356 = vld [vmem:[%s3 + $0xc] sm:$0xf]
    %v357 = vpack.c.bf16 %v339, %v337
    %v358 = vpack.c.bf16 %v340, %v338
    %v359 = vpack.c.bf16 %v343, %v341
    %v360 = vpack.c.bf16 %v344, %v342
    %v361 = vpack.c.bf16 %v347, %v345
    %v362 = vpack.c.bf16 %v348, %v346
    %v363 = vpack.c.bf16 %v351, %v349
    %v364 = vpack.c.bf16 %v352, %v350
    %v365 = vld [vmem:[%s4] sm:$0xff]
    %v366 = vld [vmem:[%s4 + $0x8] sm:$0xff]
    %v367 = vld [vmem:[%s4 + $0x10] sm:$0xff]
    %v368 = vld [vmem:[%s4 + $0x18] sm:$0xff]
    %370 = vset.pattern.permute.xlu0 0
    %371 = vperm.xlu0 %370, %v365
    %v372 = vpop.permute.xlu0 %371
    %375 = vset.pattern.permute.xlu0 0
    %376 = vperm.xlu0 %375, %v366
    %v377 = vpop.permute.xlu0 %376
    %380 = vset.pattern.permute.xlu0 0
    %381 = vperm.xlu0 %380, %v367
    %v382 = vpop.permute.xlu0 %381
    %385 = vset.pattern.permute.xlu0 0
    %386 = vperm.xlu0 %385, %v368
    %v387 = vpop.permute.xlu0 %386
    %v393 = vunpack.c.l.b16 %v353
    %v394 = vunpack.c.l.b16 %v354
    %v395 = vunpack.c.l.b16 %v355
    %v396 = vunpack.c.l.b16 %v356
    %v397 = vpack.c.b16 %v394, %v393
    %v398 = vpack.c.b16 %v396, %v395
    %vm399 = vcmask 523264
    %v401 = vsel %vm399, %v397, 0
    %v404 = vsel %vm399, %v398, 0
    %406 = vmatpush.bf16.msra.mxu0 0
    %407 = vmatpush.bf16.msra.mxu0 0
    %408 = vmatpush.bf16.msra.mxu0 0
    %409 = vmatpush.bf16.msra.mxu0 0
    %410 = vmatpush.bf16.msra.mxu0 %v363
    %411 = vmatpush.bf16.msra.mxu0 %v361
    %412 = vmatpush.bf16.msra.mxu0 %v359
    %413 = vmatpush.bf16.msra.mxu0 %v357
    %414 = vmatmul.bf16.gmra.mxu0 %v401
    %v415 = vpop.f32.mrf.mxu0
    %v416 = vadd.f32 %v372, %v415
    %v417 = vpop.f32.mrf.mxu0
    %v418 = vadd.f32 %v377, %v417
    %419 = vmatmul.bf16.gmra.mxu0 %v404
    %v420 = vpop.f32.mrf.mxu0
    %v421 = vadd.f32 %v382, %v420
    %v422 = vpop.f32.mrf.mxu0
    %v423 = vadd.f32 %v387, %v422
    %424 = vdwg.mxu0
    %425 = vmatpush.bf16.msra.mxu0 0
    %426 = vmatpush.bf16.msra.mxu0 0
    %427 = vmatpush.bf16.msra.mxu0 0
    %428 = vmatpush.bf16.msra.mxu0 0
    %429 = vmatpush.bf16.msra.mxu0 %v364
    %430 = vmatpush.bf16.msra.mxu0 %v362
    %431 = vmatpush.bf16.msra.mxu0 %v360
    %432 = vmatpush.bf16.msra.mxu0 %v358
    %433 = vmatmul.bf16.gmra.mxu0 %v401
    %v434 = vpop.f32.mrf.mxu0
    %v435 = vadd.f32 %v372, %v434
    %v436 = vpop.f32.mrf.mxu0
    %v437 = vadd.f32 %v377, %v436
    %438 = vmatmul.bf16.gmra.mxu0 %v404
    %v439 = vpop.f32.mrf.mxu0
    %v440 = vadd.f32 %v382, %v439
    %v441 = vpop.f32.mrf.mxu0
    %v442 = vadd.f32 %v387, %v441
    %443 = vdwg.mxu0
    %v444 = vmax.f32 %v416, 0.0
    %v445 = vmax.f32 %v435, 0.0
    %v446 = vmax.f32 %v418, 0.0
    %v447 = vmax.f32 %v437, 0.0
    %v448 = vmax.f32 %v421, 0.0
    %v449 = vmax.f32 %v440, 0.0
    %v450 = vmax.f32 %v423, 0.0
    %v451 = vmax.f32 %v442, 0.0
    %v452 = vld [vmem:[%s5] sm:$0xff]
    %v453 = vld [vmem:[%s5 + $0x8] sm:$0xff]
    %v454 = vld [vmem:[%s5 + $0x10] sm:$0xff]
    %v455 = vld [vmem:[%s5 + $0x18] sm:$0xff]
    %457 = vset.pattern.permute.xlu0 0
    %458 = vperm.xlu0 %457, %v452
    %v459 = vpop.permute.xlu0 %458
    %462 = vset.pattern.permute.xlu0 0
    %463 = vperm.xlu0 %462, %v453
    %v464 = vpop.permute.xlu0 %463
    %467 = vset.pattern.permute.xlu0 0
    %468 = vperm.xlu0 %467, %v454
    %v469 = vpop.permute.xlu0 %468
    %472 = vset.pattern.permute.xlu0 0
    %473 = vperm.xlu0 %472, %v455
    %v474 = vpop.permute.xlu0 %473
    %v476 = vmul.f32 %v459, %v444
    %v477 = vmul.f32 %v459, %v445
    %v478 = vmul.f32 %v464, %v446
    %v479 = vmul.f32 %v464, %v447
    %v480 = vmul.f32 %v469, %v448
    %v481 = vmul.f32 %v469, %v449
    %v482 = vmul.f32 %v474, %v450
    %v483 = vmul.f32 %v474, %v451
    %v484 = vadd.f32 %v476, %v478
    %v485 = vadd.f32 %v484, %v480
    %v486 = vadd.f32 %v485, %v482
    %v487 = vrot.slane %v486, 4
    %v488 = vadd.f32 %v486, %v487
    %v489 = vrot.slane %v488, 2
    %v490 = vadd.f32 %v488, %v489
    %v491 = vrot.slane %v490, 1
    %v492 = vadd.f32 %v490, %v491
    %v493 = vadd.f32 %v477, %v479
    %v494 = vadd.f32 %v493, %v481
    %v495 = vadd.f32 %v494, %v483
    %v496 = vrot.slane %v495, 4
    %v497 = vadd.f32 %v495, %v496
    %v498 = vrot.slane %v497, 2
    %v499 = vadd.f32 %v497, %v498
    %v500 = vrot.slane %v499, 1
    %v501 = vadd.f32 %v499, %v500
    %v502 = vld [vmem:[#allocation2] sm:$0x1]
    %504 = vset.pattern.permute.xlu0 0
    %505 = vperm.xlu0 %504, %v502
    %v506 = vpop.permute.xlu0 %505
    %v508 = vperm.slane %v506, 0
    %v509 = vadd.f32 %v492, %v508
    %v510 = vadd.f32 %v501, %v508
    %v513 = vrot.slane %v510, 7
    %vm514 = vcmask 1040384
    %v515 = vsel %vm514, %v509, %v513
    %v517 = vlaneseq
    %vm518 = vcmp.ge.s32.totalorder %v517, 0
    %vm519 = vcmp.lt.s32.totalorder %v517, 256
    %vm520 = vmand %vm518, %vm519
    %521 = vst.msk [vmem:[#allocation3] sm:$0x3] %vm520, %v515
    // Predicated region
    $region30: #{tpu_custom_call.1} parent=1 // pred_check
      _
    $region31: #{tpu_custom_call.1} parent=1 // pred_check_branch
      %523 = sbr.rel (0) target = $region33
    $region32: #{tpu_custom_call.1} parent=1 // pred_region
      %525 = vsyncadd [#allocation4], 0
      %s527 = sshll.u32 [#allocation3], 4
      %s528 = int_to_ptr.vmem [resolvable:$true] %s527
      %s529 = sshll.u32 %s7, 4
      %s530 = int_to_ptr.hbm [resolvable:$true] %s529
      %532 = dma.vmem_to_hbm [thread:$0]  %s528, 32, %s530, [#allocation4]
    $region33: #{tpu_custom_call.1} parent=1 // pred_fallthru
      _
    // Predicated region
    $region34: #{tpu_custom_call.1} parent=1 // pred_check
      _
    $region35: #{tpu_custom_call.1} parent=1 // pred_check_branch
      %534 = sbr.rel (0) target = $region37
    $region36: #{tpu_custom_call.1} parent=1 // pred_region
      %536 = dma.done [#allocation4], 32
    $region37: #{tpu_custom_call.1} parent=1 // pred_fallthru
      _
    %537 = vsyncpa [#allocation4], 1

</llo_original>
